<compile_context>
chip_gen: v5e
topology: v5e:2x2
jax: 0.10.0
libtpu: 0.0.40
codegen_flags: <defaults>
</compile_context>

<pallas_src>
import jax
import jax.numpy as jnp
from jax.experimental import pallas as pl
from jax.experimental.pallas import tpu as pltpu

ODE_UNFOLDS = 2
EPSILON = 1e-8


def ltc_cell_kernel(x_rep_ref, hx_rep_ref, vecs_ref, rec_ref, sens_ref, out_ref):
    U, BU = hx_rep_ref.shape
    B = BU // U

    # Flat (1, B*U) per-(b, j) vectors, b-major (column c = b*U + j).
    gleak = vecs_ref[0:1, :]
    vleak = vecs_ref[1:2, :]
    cm = vecs_ref[2:3, :]
    ts = vecs_ref[3:4, :]
    v_flat = vecs_ref[4:5, :]                 # hx flattened row-major: v[b, j]

    # ---- sensory block (independent of v_pre -> computed once, hoisted) ----
    s_sigma = sens_ref[0]
    s_mu = sens_ref[1]
    s_w = sens_ref[2]
    s_erev = sens_ref[3]
    in_w = sens_ref[4]
    in_b = sens_ref[5]                        # all (F, B*U), pre-tiled in wrapper
    x_rep = x_rep_ref[...] * in_w + in_b      # mapped input: x[b, f] at [f, b*U + j]
    sens_act = s_w * jax.nn.sigmoid(s_sigma * (x_rep - s_mu))                    # (F, B*U)
    w_num_sensory = jnp.sum(sens_act * s_erev, axis=0, keepdims=True)            # (1, B*U)
    w_den_sensory = jnp.sum(sens_act, axis=0, keepdims=True)                     # (1, B*U)

    # ---- loop-invariant terms (hoisted out of the unfold loop) ----
    cm_t = cm * (float(ODE_UNFOLDS) * pl.reciprocal(ts + 1.0, approx=False))     # (1, B*U)
    gleak_vleak = gleak * vleak

    sigma = rec_ref[0]
    mu = rec_ref[1]
    w = rec_ref[2]
    erev = rec_ref[3]                         # all (U, B*U), pre-tiled in wrapper

    # eye(U) used for the exact lanes->sublanes relayout of the state between
    # unfolds (only built once; only used ODE_UNFOLDS-1 times).
    row_i = jax.lax.broadcasted_iota(jnp.int32, (U, U), 0)
    col_i = jax.lax.broadcasted_iota(jnp.int32, (U, U), 1)
    eye_u = (row_i == col_i).astype(jnp.float32)

    # Pre-synaptic tile for t=0 comes pre-broadcast from the wrapper:
    # v_rep[i, b*U + j] = v[b, i]
    v_rep = hx_rep_ref[...]                   # (U, B*U)

    for t in range(ODE_UNFOLDS):
        w_act = w * jax.nn.sigmoid(sigma * (v_rep - mu))                          # (U, B*U)
        w_num = jnp.sum(w_act * erev, axis=0, keepdims=True) + w_num_sensory      # (1, B*U)
        w_den = jnp.sum(w_act, axis=0, keepdims=True) + w_den_sensory             # (1, B*U)

        numerator = cm_t * v_flat + gleak_vleak + w_num
        denominator = cm_t + gleak + w_den
        v_flat = numerator * pl.reciprocal(denominator + EPSILON, approx=False)   # (1, B*U)

        if t + 1 < ODE_UNFOLDS:
            # Rebuild the pre-synaptic tile for the next unfold directly:
            # v_rep[i, b*U + j] = v_flat[0, b*U + i]  (exact one-hot masked sum —
            # no reshape/transpose, only broadcasts, selects and lane reductions).
            blocks = []
            for b in range(B):
                blk = v_flat[:, b * U:(b + 1) * U]                                # (1, U)
                col = jnp.sum(jnp.broadcast_to(blk, (U, U)) * eye_u,
                              axis=1, keepdims=True)                              # (U, 1)
                blocks.append(jnp.broadcast_to(col, (U, U)))                      # (U, U)
            v_rep = jnp.concatenate(blocks, axis=1)                               # (U, B*U)

    # TODO(synk): torch's debug-only `if torch.any(torch.isnan(v_pre)): breakpoint()`
    # is intentionally not translated.
    out_ref[...] = v_flat                     # dense (1, B*U) lane store


@jax.jit
def ltc_cell_forward(params, inputs, hx, ts):
    """inputs: (B, F), hx: (B, U), ts: (B,) or (B, 1). Returns next_state (B, U)."""
    f32 = jnp.float32
    inputs = inputs.astype(f32)
    hx = hx.astype(f32)
    B, F = inputs.shape
    U = hx.shape[1]
    BU = B * U
    ts_vec = jnp.reshape(ts, (-1,)).astype(f32)

    # ---- layout plumbing (pure XLA, outside the kernel): pre-tile parameters
    #      and state to the lane-dense b-major (*, B*U) layout, packed into 5 inputs.
    def tile_cols(p):                                   # (R, U) -> (R, B*U); col c -> p[:, c % U]
        return jnp.tile(p.astype(f32), (1, B))

    rec_pack = jnp.stack([tile_cols(params["sigma"]), tile_cols(params["mu"]),
                          tile_cols(params["w"]), tile_cols(params["erev"])])        # (4, U, B*U)
    sens_pack = jnp.stack([
        tile_cols(params["sensory_sigma"]), tile_cols(params["sensory_mu"]),
        tile_cols(params["sensory_w"]), tile_cols(params["sensory_erev"]),
        jnp.broadcast_to(params["input_w"].astype(f32)[:, None], (F, BU)),
        jnp.broadcast_to(params["input_b"].astype(f32)[:, None], (F, BU)),
    ])                                                                                # (6, F, B*U)
    vecs = jnp.stack([jnp.tile(params["gleak"].astype(f32), B),
                      jnp.tile(params["vleak"].astype(f32), B),
                      jnp.tile(params["cm"].astype(f32), B),
                      jnp.repeat(ts_vec, U),
                      hx.reshape(-1)])                                                # (5, B*U)
    inputs_rep = jnp.repeat(inputs.T, U, axis=1)                                      # (F, B*U)
    hx_rep = jnp.repeat(hx.T, U, axis=1)                                              # (U, B*U)

    out_flat = pl.pallas_call(
        ltc_cell_kernel,
        out_shape=jax.ShapeDtypeStruct((1, BU), f32),
        in_specs=[pl.BlockSpec(memory_space=pltpu.MemorySpace.VMEM)] * 5,
        out_specs=pl.BlockSpec(memory_space=pltpu.MemorySpace.VMEM),
    )(inputs_rep, hx_rep, vecs, rec_pack, sens_pack)
    return out_flat.reshape(B, U)


def ltc_cell_reference(params, inputs, hx, ts):
    """Plain-JAX reference matching the torch forward exactly (for validation)."""
    ts2 = jnp.reshape(ts, (-1, 1)).astype(jnp.float32)
    x = inputs * params["input_w"] + params["input_b"]
    v_pre = hx

    def _sig(v, mu, sigma):
        return jax.nn.sigmoid(sigma * (v[..., None] - mu))

    sens_act = params["sensory_w"] * _sig(x, params["sensory_mu"], params["sensory_sigma"])
    w_num_s = jnp.sum(sens_act * params["sensory_erev"], axis=1)
    w_den_s = jnp.sum(sens_act, axis=1)
    cm_t = params["cm"][None, :] / ((ts2 + 1.0) / ODE_UNFOLDS)
    for _ in range(ODE_UNFOLDS):
        w_act = params["w"] * _sig(v_pre, params["mu"], params["sigma"])
        w_num = jnp.sum(w_act * params["erev"], axis=1) + w_num_s
        w_den = jnp.sum(w_act, axis=1) + w_den_s
        num = cm_t * v_pre + params["gleak"] * params["vleak"] + w_num
        den = cm_t + params["gleak"] + w_den
        v_pre = num / (den + EPSILON)
    return v_pre


def init_params(key, in_features, units):
    """Deterministic parameter init matching the shapes / ranges in __init__."""
    ranges = {
        "gleak": (0.001, 1.0), "vleak": (-0.2, 0.2), "cm": (0.4, 0.6),
        "w": (0.001, 1.0), "sigma": (3.0, 8.0), "mu": (0.3, 0.8),
        "sensory_w": (0.001, 1.0), "sensory_sigma": (3.0, 8.0),
        "sensory_mu": (0.3, 0.8),
    }
    shapes = {
        "gleak": (units,), "vleak": (units,), "cm": (units,),
        "sigma": (units, units), "mu": (units, units), "w": (units, units),
        "sensory_sigma": (in_features, units), "sensory_mu": (in_features, units),
        "sensory_w": (in_features, units),
    }
    params = {}
    keys = jax.random.split(key, len(shapes) + 2)
    for i, (name, shp) in enumerate(sorted(shapes.items())):
        lo, hi = ranges[name]
        params[name] = jax.random.uniform(
            keys[i], shp, dtype=jnp.float32, minval=lo, maxval=hi)
    # erev matrices: random choice of {-1, +1}
    params["erev"] = jnp.where(
        jax.random.bernoulli(keys[-2], 0.5, (units, units)), 1.0, -1.0
    ).astype(jnp.float32)
    params["sensory_erev"] = jnp.where(
        jax.random.bernoulli(keys[-1], 0.5, (in_features, units)), 1.0, -1.0
    ).astype(jnp.float32)
    params["input_w"] = jnp.ones((in_features,), jnp.float32)
    params["input_b"] = jnp.zeros((in_features,), jnp.float32)
    return params


if __name__ == "__main__":
    B, F, U = 4, 8, 32  # batch, in_features, units  (B*U = 128 -> fully lane-dense)

    root = jax.random.PRNGKey(0)
    kp, kx, kh, kt = jax.random.split(root, 4)
    params = init_params(kp, F, U)

    inputs = jax.random.normal(kx, (B, F), dtype=jnp.float32)
    hx = jax.random.normal(kh, (B, U), dtype=jnp.float32)
    ts = jax.random.uniform(kt, (B,), dtype=jnp.float32, minval=0.1, maxval=2.0)

    out = ltc_cell_forward(params, inputs, hx, ts)
    out = jax.block_until_ready(out)

    ref = jax.block_until_ready(ltc_cell_reference(params, inputs, hx, ts))
    assert out.shape == (B, U)
    assert jnp.allclose(out, ref, atol=1e-5, rtol=1e-5), (out, ref)

    print("KERNEL_OK")
</pallas_src>

<mosaic_0001>
module attributes {stable_mosaic.version = 11 : i64} {
  func.func @ltc_cell_kernel(%arg0: memref<8x128xf32, #tpu.memory_space<vmem>>, %arg1: memref<32x128xf32, #tpu.memory_space<vmem>>, %arg2: memref<5x128xf32, #tpu.memory_space<vmem>>, %arg3: memref<4x32x128xf32, #tpu.memory_space<vmem>>, %arg4: memref<6x8x128xf32, #tpu.memory_space<vmem>>, %arg5: memref<1x128xf32, #tpu.memory_space<vmem>>) attributes {dimension_semantics = [], scalar_prefetch = 0 : i64, scratch_operands = 0 : i64, tpu.core_type = #tpu.core_type<tc>} {
    %c0 = arith.constant 0 : index
    %c0_0 = arith.constant 0 : index
    %0 = vector.load %arg2[%c0, %c0_0] : memref<5x128xf32, #tpu.memory_space<vmem>>, vector<1x128xf32>
    %c1 = arith.constant 1 : index
    %c0_1 = arith.constant 0 : index
    %1 = vector.load %arg2[%c1, %c0_1] : memref<5x128xf32, #tpu.memory_space<vmem>>, vector<1x128xf32>
    %c2 = arith.constant 2 : index
    %c0_2 = arith.constant 0 : index
    %2 = vector.load %arg2[%c2, %c0_2] : memref<5x128xf32, #tpu.memory_space<vmem>>, vector<1x128xf32>
    %c3 = arith.constant 3 : index
    %c0_3 = arith.constant 0 : index
    %3 = vector.load %arg2[%c3, %c0_3] : memref<5x128xf32, #tpu.memory_space<vmem>>, vector<1x128xf32>
    %c4 = arith.constant 4 : index
    %c0_4 = arith.constant 0 : index
    %4 = vector.load %arg2[%c4, %c0_4] : memref<5x128xf32, #tpu.memory_space<vmem>>, vector<1x128xf32>
    %c0_5 = arith.constant 0 : index
    %c0_6 = arith.constant 0 : index
    %c0_7 = arith.constant 0 : index
    %5 = vector.load %arg4[%c0_5, %c0_6, %c0_7] : memref<6x8x128xf32, #tpu.memory_space<vmem>>, vector<1x8x128xf32>
    %6 = vector.shape_cast %5 : vector<1x8x128xf32> to vector<8x128xf32>
    %c1_8 = arith.constant 1 : index
    %c0_9 = arith.constant 0 : index
    %c0_10 = arith.constant 0 : index
    %7 = vector.load %arg4[%c1_8, %c0_9, %c0_10] : memref<6x8x128xf32, #tpu.memory_space<vmem>>, vector<1x8x128xf32>
    %8 = vector.shape_cast %7 : vector<1x8x128xf32> to vector<8x128xf32>
    %c2_11 = arith.constant 2 : index
    %c0_12 = arith.constant 0 : index
    %c0_13 = arith.constant 0 : index
    %9 = vector.load %arg4[%c2_11, %c0_12, %c0_13] : memref<6x8x128xf32, #tpu.memory_space<vmem>>, vector<1x8x128xf32>
    %10 = vector.shape_cast %9 : vector<1x8x128xf32> to vector<8x128xf32>
    %c3_14 = arith.constant 3 : index
    %c0_15 = arith.constant 0 : index
    %c0_16 = arith.constant 0 : index
    %11 = vector.load %arg4[%c3_14, %c0_15, %c0_16] : memref<6x8x128xf32, #tpu.memory_space<vmem>>, vector<1x8x128xf32>
    %12 = vector.shape_cast %11 : vector<1x8x128xf32> to vector<8x128xf32>
    %c4_17 = arith.constant 4 : index
    %c0_18 = arith.constant 0 : index
    %c0_19 = arith.constant 0 : index
    %13 = vector.load %arg4[%c4_17, %c0_18, %c0_19] : memref<6x8x128xf32, #tpu.memory_space<vmem>>, vector<1x8x128xf32>
    %14 = vector.shape_cast %13 : vector<1x8x128xf32> to vector<8x128xf32>
    %c5 = arith.constant 5 : index
    %c0_20 = arith.constant 0 : index
    %c0_21 = arith.constant 0 : index
    %15 = vector.load %arg4[%c5, %c0_20, %c0_21] : memref<6x8x128xf32, #tpu.memory_space<vmem>>, vector<1x8x128xf32>
    %16 = vector.shape_cast %15 : vector<1x8x128xf32> to vector<8x128xf32>
    %c0_22 = arith.constant 0 : index
    %c0_23 = arith.constant 0 : index
    %17 = vector.load %arg0[%c0_22, %c0_23] : memref<8x128xf32, #tpu.memory_space<vmem>>, vector<8x128xf32>
    %18 = arith.mulf %17, %14 : vector<8x128xf32>
    %19 = arith.addf %18, %16 : vector<8x128xf32>
    %20 = arith.subf %19, %8 : vector<8x128xf32>
    %21 = arith.mulf %6, %20 : vector<8x128xf32>
    %22 = arith.negf %21 : vector<8x128xf32>
    %23 = math.exp %22 : vector<8x128xf32>
    %cst = arith.constant 1.000000e+00 : f32
    %24 = vector.broadcast %cst : f32 to vector<8x128xf32>
    %25 = arith.addf %24, %23 : vector<8x128xf32>
    %26 = arith.divf %24, %25 : vector<8x128xf32>
    %27 = arith.mulf %10, %26 : vector<8x128xf32>
    %28 = arith.mulf %27, %12 : vector<8x128xf32>
    %cst_24 = arith.constant dense<0.000000e+00> : vector<128xf32>
    %29 = vector.multi_reduction <add>, %28, %cst_24 [0] : vector<8x128xf32> to vector<128xf32>
    %30 = vector.shape_cast %29 : vector<128xf32> to vector<1x128xf32>
    %cst_25 = arith.constant dense<0.000000e+00> : vector<128xf32>
    %31 = vector.multi_reduction <add>, %27, %cst_25 [0] : vector<8x128xf32> to vector<128xf32>
    %32 = vector.shape_cast %31 : vector<128xf32> to vector<1x128xf32>
    %cst_26 = arith.constant 1.000000e+00 : f32
    %33 = vector.broadcast %cst_26 : f32 to vector<1x128xf32>
    %34 = arith.addf %3, %33 : vector<1x128xf32>
    %35 = tpu.reciprocal %34 : vector<1x128xf32> -> vector<1x128xf32>
    %cst_27 = arith.constant 2.000000e+00 : f32
    %36 = vector.broadcast %cst_27 : f32 to vector<1x128xf32>
    %37 = arith.mulf %36, %35 : vector<1x128xf32>
    %38 = arith.mulf %2, %37 : vector<1x128xf32>
    %39 = arith.mulf %0, %1 : vector<1x128xf32>
    %c0_28 = arith.constant 0 : index
    %c0_29 = arith.constant 0 : index
    %c0_30 = arith.constant 0 : index
    %40 = vector.load %arg3[%c0_28, %c0_29, %c0_30] : memref<4x32x128xf32, #tpu.memory_space<vmem>>, vector<1x32x128xf32>
    %41 = vector.shape_cast %40 : vector<1x32x128xf32> to vector<32x128xf32>
    %c1_31 = arith.constant 1 : index
    %c0_32 = arith.constant 0 : index
    %c0_33 = arith.constant 0 : index
    %42 = vector.load %arg3[%c1_31, %c0_32, %c0_33] : memref<4x32x128xf32, #tpu.memory_space<vmem>>, vector<1x32x128xf32>
    %43 = vector.shape_cast %42 : vector<1x32x128xf32> to vector<32x128xf32>
    %c2_34 = arith.constant 2 : index
    %c0_35 = arith.constant 0 : index
    %c0_36 = arith.constant 0 : index
    %44 = vector.load %arg3[%c2_34, %c0_35, %c0_36] : memref<4x32x128xf32, #tpu.memory_space<vmem>>, vector<1x32x128xf32>
    %45 = vector.shape_cast %44 : vector<1x32x128xf32> to vector<32x128xf32>
    %c3_37 = arith.constant 3 : index
    %c0_38 = arith.constant 0 : index
    %c0_39 = arith.constant 0 : index
    %46 = vector.load %arg3[%c3_37, %c0_38, %c0_39] : memref<4x32x128xf32, #tpu.memory_space<vmem>>, vector<1x32x128xf32>
    %47 = vector.shape_cast %46 : vector<1x32x128xf32> to vector<32x128xf32>
    %48 = tpu.iota {dimensions = array<i32: 0>} : vector<32x32xi32>
    %49 = tpu.iota {dimensions = array<i32: 1>} : vector<32x32xi32>
    %50 = arith.cmpi eq, %48, %49 : vector<32x32xi32>
    %51 = arith.extui %50 : vector<32x32xi1> to vector<32x32xi32>
    %52 = arith.sitofp %51 : vector<32x32xi32> to vector<32x32xf32>
    %c0_40 = arith.constant 0 : index
    %c0_41 = arith.constant 0 : index
    %53 = vector.load %arg1[%c0_40, %c0_41] : memref<32x128xf32, #tpu.memory_space<vmem>>, vector<32x128xf32>
    %54 = arith.subf %53, %43 : vector<32x128xf32>
    %55 = arith.mulf %41, %54 : vector<32x128xf32>
    %56 = arith.negf %55 : vector<32x128xf32>
    %57 = math.exp %56 : vector<32x128xf32>
    %cst_42 = arith.constant 1.000000e+00 : f32
    %58 = vector.broadcast %cst_42 : f32 to vector<32x128xf32>
    %59 = arith.addf %58, %57 : vector<32x128xf32>
    %60 = arith.divf %58, %59 : vector<32x128xf32>
    %61 = arith.mulf %45, %60 : vector<32x128xf32>
    %62 = arith.mulf %61, %47 : vector<32x128xf32>
    %cst_43 = arith.constant dense<0.000000e+00> : vector<128xf32>
    %63 = vector.multi_reduction <add>, %62, %cst_43 [0] : vector<32x128xf32> to vector<128xf32>
    %64 = vector.shape_cast %63 : vector<128xf32> to vector<1x128xf32>
    %65 = arith.addf %64, %30 : vector<1x128xf32>
    %cst_44 = arith.constant dense<0.000000e+00> : vector<128xf32>
    %66 = vector.multi_reduction <add>, %61, %cst_44 [0] : vector<32x128xf32> to vector<128xf32>
    %67 = vector.shape_cast %66 : vector<128xf32> to vector<1x128xf32>
    %68 = arith.addf %67, %32 : vector<1x128xf32>
    %69 = arith.mulf %38, %4 : vector<1x128xf32>
    %70 = arith.addf %69, %39 : vector<1x128xf32>
    %71 = arith.addf %70, %65 : vector<1x128xf32>
    %72 = arith.addf %38, %0 : vector<1x128xf32>
    %73 = arith.addf %72, %68 : vector<1x128xf32>
    %cst_45 = arith.constant 9.99999993E-9 : f32
    %74 = vector.broadcast %cst_45 : f32 to vector<1x128xf32>
    %75 = arith.addf %73, %74 : vector<1x128xf32>
    %76 = tpu.reciprocal %75 : vector<1x128xf32> -> vector<1x128xf32>
    %77 = arith.mulf %71, %76 : vector<1x128xf32>
    %78 = vector.extract_strided_slice %77 {offsets = [0, 0], sizes = [1, 32], strides = [1, 1]} : vector<1x128xf32> to vector<1x32xf32>
    %79 = vector.shape_cast %78 : vector<1x32xf32> to vector<1x32xf32>
    %80 = vector.broadcast %79 : vector<1x32xf32> to vector<32x32xf32>
    %81 = arith.mulf %80, %52 : vector<32x32xf32>
    %cst_46 = arith.constant dense<0.000000e+00> : vector<32xf32>
    %82 = vector.multi_reduction <add>, %81, %cst_46 [1] : vector<32x32xf32> to vector<32xf32>
    %83 = vector.shape_cast %82 : vector<32xf32> to vector<32x1xf32>
    %84 = vector.shape_cast %83 : vector<32x1xf32> to vector<32x1xf32>
    %85 = vector.broadcast %84 : vector<32x1xf32> to vector<32x32xf32>
    %86 = vector.extract_strided_slice %77 {offsets = [0, 32], sizes = [1, 32], strides = [1, 1]} : vector<1x128xf32> to vector<1x32xf32>
    %87 = vector.shape_cast %86 : vector<1x32xf32> to vector<1x32xf32>
    %88 = vector.broadcast %87 : vector<1x32xf32> to vector<32x32xf32>
    %89 = arith.mulf %88, %52 : vector<32x32xf32>
    %cst_47 = arith.constant dense<0.000000e+00> : vector<32xf32>
    %90 = vector.multi_reduction <add>, %89, %cst_47 [1] : vector<32x32xf32> to vector<32xf32>
    %91 = vector.shape_cast %90 : vector<32xf32> to vector<32x1xf32>
    %92 = vector.shape_cast %91 : vector<32x1xf32> to vector<32x1xf32>
    %93 = vector.broadcast %92 : vector<32x1xf32> to vector<32x32xf32>
    %94 = vector.extract_strided_slice %77 {offsets = [0, 64], sizes = [1, 32], strides = [1, 1]} : vector<1x128xf32> to vector<1x32xf32>
    %95 = vector.shape_cast %94 : vector<1x32xf32> to vector<1x32xf32>
    %96 = vector.broadcast %95 : vector<1x32xf32> to vector<32x32xf32>
    %97 = arith.mulf %96, %52 : vector<32x32xf32>
    %cst_48 = arith.constant dense<0.000000e+00> : vector<32xf32>
    %98 = vector.multi_reduction <add>, %97, %cst_48 [1] : vector<32x32xf32> to vector<32xf32>
    %99 = vector.shape_cast %98 : vector<32xf32> to vector<32x1xf32>
    %100 = vector.shape_cast %99 : vector<32x1xf32> to vector<32x1xf32>
    %101 = vector.broadcast %100 : vector<32x1xf32> to vector<32x32xf32>
    %102 = vector.extract_strided_slice %77 {offsets = [0, 96], sizes = [1, 32], strides = [1, 1]} : vector<1x128xf32> to vector<1x32xf32>
    %103 = vector.shape_cast %102 : vector<1x32xf32> to vector<1x32xf32>
    %104 = vector.broadcast %103 : vector<1x32xf32> to vector<32x32xf32>
    %105 = arith.mulf %104, %52 : vector<32x32xf32>
    %cst_49 = arith.constant dense<0.000000e+00> : vector<32xf32>
    %106 = vector.multi_reduction <add>, %105, %cst_49 [1] : vector<32x32xf32> to vector<32xf32>
    %107 = vector.shape_cast %106 : vector<32xf32> to vector<32x1xf32>
    %108 = vector.shape_cast %107 : vector<32x1xf32> to vector<32x1xf32>
    %109 = vector.broadcast %108 : vector<32x1xf32> to vector<32x32xf32>
    %110 = tpu.concatenate %85, %93, %101, %109 in 1 : vector<32x32xf32>, vector<32x32xf32>, vector<32x32xf32>, vector<32x32xf32> -> vector<32x128xf32>
    %111 = arith.subf %110, %43 : vector<32x128xf32>
    %112 = arith.mulf %41, %111 : vector<32x128xf32>
    %113 = arith.negf %112 : vector<32x128xf32>
    %114 = math.exp %113 : vector<32x128xf32>
    %cst_50 = arith.constant 1.000000e+00 : f32
    %115 = vector.broadcast %cst_50 : f32 to vector<32x128xf32>
    %116 = arith.addf %115, %114 : vector<32x128xf32>
    %117 = arith.divf %115, %116 : vector<32x128xf32>
    %118 = arith.mulf %45, %117 : vector<32x128xf32>
    %119 = arith.mulf %118, %47 : vector<32x128xf32>
    %cst_51 = arith.constant dense<0.000000e+00> : vector<128xf32>
    %120 = vector.multi_reduction <add>, %119, %cst_51 [0] : vector<32x128xf32> to vector<128xf32>
    %121 = vector.shape_cast %120 : vector<128xf32> to vector<1x128xf32>
    %122 = arith.addf %121, %30 : vector<1x128xf32>
    %cst_52 = arith.constant dense<0.000000e+00> : vector<128xf32>
    %123 = vector.multi_reduction <add>, %118, %cst_52 [0] : vector<32x128xf32> to vector<128xf32>
    %124 = vector.shape_cast %123 : vector<128xf32> to vector<1x128xf32>
    %125 = arith.addf %124, %32 : vector<1x128xf32>
    %126 = arith.mulf %38, %77 : vector<1x128xf32>
    %127 = arith.addf %126, %39 : vector<1x128xf32>
    %128 = arith.addf %127, %122 : vector<1x128xf32>
    %129 = arith.addf %38, %0 : vector<1x128xf32>
    %130 = arith.addf %129, %125 : vector<1x128xf32>
    %cst_53 = arith.constant 9.99999993E-9 : f32
    %131 = vector.broadcast %cst_53 : f32 to vector<1x128xf32>
    %132 = arith.addf %130, %131 : vector<1x128xf32>
    %133 = tpu.reciprocal %132 : vector<1x128xf32> -> vector<1x128xf32>
    %134 = arith.mulf %128, %133 : vector<1x128xf32>
    %c0_54 = arith.constant 0 : index
    %c0_55 = arith.constant 0 : index
    %135 = vector.load %arg5[%c0_54, %c0_55] : memref<1x128xf32, #tpu.memory_space<vmem>>, vector<1x128xf32>
    tpu.vector_store %arg5[%c0_54, %c0_55], %134 {strides = array<i32>} : memref<1x128xf32, #tpu.memory_space<vmem>>, vector<1x128xf32>,
    return
  }
}

</mosaic_0001>

<llo_original>
// kernel: tile.98
$region0: #{tile.98}
  #allocation0 [shape = 's32[1]{0}', space=sflag, size = 0x4, scoped, tag = 'scoped memory for tile.98']
  %s0 = inlined_call_operand.vmem [shape: f32[32], index: 0, kind: input, shape index: {}]
  %s1 = inlined_call_operand.vmem [shape: f32[4,32], index: 1, kind: output, shape index: {}]
  // Predicated region
  $region2: #{tile.98} parent=0 // pred_check
    _
  $region3: #{tile.98} parent=0 // pred_check_branch
    %3 = sbr.rel (0) target = $region5
  $region4: #{tile.98} parent=0 // pred_region
    _
  $region5: #{tile.98} parent=0 // pred_fallthru
    _
  %v4 = vld [vmem:[%s0] ss:$0 sm:$0xff]
  %5 = vst [vmem:[%s1] sm:$0xf] %v4

// kernel: tile.107
$region0: #{tile.107}
  %s0 = inlined_call_operand.vmem [shape: f32[4,32], index: 0, kind: input, shape index: {}]
  %s1 = inlined_call_operand.vmem [shape: f32[1,128], index: 1, kind: output, shape index: {}]
  $region1: #{tile.107} parent=0
    #allocation0 [shape = 'u8[4096]{0}', space=vmem, size = 0x1000, scoped, tag = 'scoped mem for output reshape']
    #allocation1 [shape = 'u8[4096]{0}', space=vmem, size = 0x1000, scoped, tag = 'scoped mem for input reshape']
    %s3 = ssub.s32 16, 1
    %v4 = vld [vmem:[%s0] sm:%s3]
    %5 = vst [vmem:[#allocation1] sm:%s3] %v4
    %v6 = vld [vmem:[#allocation1] sm:$0x1]
    %vm7 = vcmask 261120
    %8 = vst.msk [vmem:[#allocation0] sm:$0x1] %vm7, %v6
    %s9 = scalar_lea.vmem [#allocation1], 3
    %v10 = vld [vmem:[%s9] sm:$0x1]
    %11 = vrot.lane.b32.xlu0 %v10, 96
    %v12 = vpop.permute.xlu0 %11
    %vm13 = vcmask 1048320
    %14 = vst.msk [vmem:[#allocation0] sm:$0x1] %vm13, %v12
    %s15 = scalar_lea.vmem [#allocation1], 2
    %v16 = vld [vmem:[%s15] sm:$0x1]
    %17 = vrot.lane.b32.xlu0 %v16, 64
    %v18 = vpop.permute.xlu0 %17
    %vm19 = vcmask 785920
    %20 = vst.msk [vmem:[#allocation0] sm:$0x1] %vm19, %v18
    %s21 = scalar_lea.vmem [#allocation1], 1
    %v22 = vld [vmem:[%s21] sm:$0x1]
    %23 = vrot.lane.b32.xlu0 %v22, 32
    %v24 = vpop.permute.xlu0 %23
    %vm25 = vcmask 523520
    %26 = vst.msk [vmem:[#allocation0] sm:$0x1] %vm25, %v24
    %s28 = ssub.s32 2, 1
    %v29 = vld [vmem:[#allocation0] sm:%s28]
    %s31 = ssub.s32 2, 1
    %32 = vst [vmem:[%s1] sm:%s31] %v29

// kernel: ltc_cell_forward.1
$region0: #{ltc_cell_forward.1}
  #allocation0 [shape = 'u32[]', space=smem, size = 0x4, offset = 0x4, fixed_abs, tag = 'smem constant byte address 0x4 - core index']
  #allocation1 [shape = 'u32[72,128]{1,0:T(1,128)}', space=vmem, size = 0x9000, scoped, tag = 'internal scratch']
  %s0 = inlined_call_operand.vmem [shape: f32[8,128], index: 0, kind: input, shape index: {}]
  %s1 = inlined_call_operand.vmem [shape: f32[32,128], index: 1, kind: input, shape index: {}]
  %s2 = inlined_call_operand.vmem [shape: f32[5,128], index: 2, kind: input, shape index: {}]
  %s3 = inlined_call_operand.vmem [shape: f32[4,32,128], index: 3, kind: input, shape index: {}]
  %s4 = inlined_call_operand.vmem [shape: f32[6,8,128], index: 4, kind: input, shape index: {}]
  %s5 = inlined_call_operand.vmem [shape: f32[1,128], index: 5, kind: output, shape index: {}]
  %s6 = sld [smem:[#allocation0]]
  $region30: #{ltc_cell_forward.1} parent=0
    _
  %s8 = ssub.s32 1, %s6
  %s9 = scalar_select 0, %s8, %s6
  // Predicated region
  $region2: #{ltc_cell_forward.1} parent=0 // pred_check
    _
  $region3: #{ltc_cell_forward.1} parent=0 // pred_check_branch
    %11 = sbr.rel (0) target = $region5
  $region4: #{ltc_cell_forward.1} parent=0 // pred_region
    _
  $region5: #{ltc_cell_forward.1} parent=0 // pred_fallthru
    _
  // Predicated region
  $region6: #{ltc_cell_forward.1} parent=0 // pred_check
    _
  $region7: #{ltc_cell_forward.1} parent=0 // pred_check_branch
    %13 = sbr.rel (0) target = $region9
  $region8: #{ltc_cell_forward.1} parent=0 // pred_region
    _
  $region9: #{ltc_cell_forward.1} parent=0 // pred_fallthru
    _
  // Predicated region
  $region10: #{ltc_cell_forward.1} parent=0 // pred_check
    _
  $region11: #{ltc_cell_forward.1} parent=0 // pred_check_branch
    %15 = sbr.rel (0) target = $region13
  $region12: #{ltc_cell_forward.1} parent=0 // pred_region
    _
  $region13: #{ltc_cell_forward.1} parent=0 // pred_fallthru
    _
  // Predicated region
  $region14: #{ltc_cell_forward.1} parent=0 // pred_check
    _
  $region15: #{ltc_cell_forward.1} parent=0 // pred_check_branch
    %17 = sbr.rel (0) target = $region17
  $region16: #{ltc_cell_forward.1} parent=0 // pred_region
    _
  $region17: #{ltc_cell_forward.1} parent=0 // pred_fallthru
    _
  // Predicated region
  $region18: #{ltc_cell_forward.1} parent=0 // pred_check
    _
  $region19: #{ltc_cell_forward.1} parent=0 // pred_check_branch
    %19 = sbr.rel (0) target = $region21
  $region20: #{ltc_cell_forward.1} parent=0 // pred_region
    _
  $region21: #{ltc_cell_forward.1} parent=0 // pred_fallthru
    _
  %v20 = vld [vmem:[%s2] sm:$0x1]
  %v21 = vld [vmem:[%s2 + $0x1] sm:$0x1]
  %v22 = vld [vmem:[%s2 + $0x2] sm:$0x1]
  %v23 = vld [vmem:[%s2 + $0x3] sm:$0x1]
  %v24 = vld [vmem:[%s2 + $0x4] sm:$0x1]
  %v25 = vld [vmem:[%s4] sm:$0xff]
  %s26 = scalar_lea.vmem %s4, 8
  %v27 = vld [vmem:[%s26] sm:$0xff]
  %s28 = scalar_lea.vmem %s4, 16
  %v29 = vld [vmem:[%s28] sm:$0xff]
  %s30 = scalar_lea.vmem %s4, 24
  %v31 = vld [vmem:[%s30] sm:$0xff]
  %s32 = scalar_lea.vmem %s4, 32
  %v33 = vld [vmem:[%s32] sm:$0xff]
  %s34 = scalar_lea.vmem %s4, 40
  %v35 = vld [vmem:[%s34] sm:$0xff]
  %v36 = vld [vmem:[%s0] sm:$0xff]
  %v37 = vmul.f32 %v36, %v33
  %v38 = vadd.f32 %v37, %v35
  %v39 = vsub.f32 %v38, %v27
  %v40 = vmul.f32 %v25, %v39
  %v41 = vxor.u32 %v40, 2147483648
  %v42 = vmul.f32 %v41, 1.442695
  %v43 = vpow.pop %v42
  %v44 = vadd.f32 %v43, 1.0
  %v45 = vrcp.pop %v44
  %v46 = vmul.f32 %v44, %v45
  %v47 = vsub.f32 1.0, %v46
  %v48 = vmul.f32 %v45, %v47
  %v49 = vadd.f32 %v45, %v48
  %vm50 = vweird.f32 %v44
  %vm51 = vweird.f32 %v45
  %vm52 = vmor %vm50, %vm51
  %v53 = vsel %vm52, %v45, %v49
  %v54 = vand.u32 2147483647, %v44
  %vm55 = vcmp.eq.f32.partialorder %v54, 8.507059e+37
  %v56 = vand.u32 %v44, 2147483648
  %v57 = vor.u32 1.1754944e-38, %v56
  %v58 = vsel %vm55, %v57, %v53
  %v59 = vmul.f32 1.0, %v58
  %v60 = vmul.f32 %v29, %v59
  %v61 = vmul.f32 %v60, %v31
  %v62 = vrot.slane %v61, 4
  %v63 = vadd.f32 %v61, %v62
  %v64 = vrot.slane %v63, 2
  %v65 = vadd.f32 %v63, %v64
  %v66 = vrot.slane %v65, 1
  %v67 = vadd.f32 %v65, %v66
  %v68 = vrot.slane %v60, 4
  %v69 = vadd.f32 %v60, %v68
  %v70 = vrot.slane %v69, 2
  %v71 = vadd.f32 %v69, %v70
  %v72 = vrot.slane %v71, 1
  %v73 = vadd.f32 %v71, %v72
  %v74 = vadd.f32 %v23, 1.0
  %v75 = vrcp.pop %v74
  %v76 = vmul.f32 %v74, %v75
  %v77 = vsub.f32 1.0, %v76
  %v78 = vmul.f32 %v75, %v77
  %v79 = vadd.f32 %v75, %v78
  %vm80 = vweird.f32 %v74
  %vm81 = vweird.f32 %v75
  %vm82 = vmor %vm80, %vm81
  %v83 = vsel %vm82, %v75, %v79
  %v84 = vand.u32 2147483647, %v74
  %vm85 = vcmp.eq.f32.partialorder %v84, 8.507059e+37
  %v86 = vand.u32 %v74, 2147483648
  %v87 = vor.u32 1.1754944e-38, %v86
  %v88 = vsel %vm85, %v87, %v83
  %v89 = vmul.f32 %v88, 2.0
  %v90 = vmul.f32 %v22, %v89
  %v91 = vmul.f32 %v20, %v21
  %v92 = vld [vmem:[%s3] sm:$0xff]
  %v93 = vld [vmem:[%s3 + $0x8] sm:$0xff]
  %v94 = vld [vmem:[%s3 + $0x10] sm:$0xff]
  %v95 = vld [vmem:[%s3 + $0x18] sm:$0xff]
  %s96 = scalar_lea.vmem %s3, 32
  %v97 = vld [vmem:[%s96] sm:$0xff]
  %v98 = vld [vmem:[%s96 + $0x8] sm:$0xff]
  %v99 = vld [vmem:[%s96 + $0x10] sm:$0xff]
  %v100 = vld [vmem:[%s96 + $0x18] sm:$0xff]
  %s101 = scalar_lea.vmem %s3, 64
  %v102 = vld [vmem:[%s101] sm:$0xff]
  %v103 = vld [vmem:[%s101 + $0x8] sm:$0xff]
  %v104 = vld [vmem:[%s101 + $0x10] sm:$0xff]
  %v105 = vld [vmem:[%s101 + $0x18] sm:$0xff]
  %s106 = scalar_lea.vmem %s3, 96
  %v107 = vld [vmem:[%s106] sm:$0xff]
  %v108 = vld [vmem:[%s106 + $0x8] sm:$0xff]
  %v109 = vld [vmem:[%s106 + $0x10] sm:$0xff]
  %v110 = vld [vmem:[%s106 + $0x18] sm:$0xff]
  %v111 = vlaneseq
  %v112 = vshrl.u32 %v111, 7
  %v113 = vadd.s32 %v112, 8
  %v114 = vadd.s32 %v112, 16
  %v115 = vadd.s32 %v112, 24
  %v116 = vlaneseq
  %v117 = vand.u32 %v116, 127
  %vm118 = vcmp.eq.s32.totalorder %v112, %v117
  %vm119 = vcmp.eq.s32.totalorder %v113, %v117
  %vm120 = vcmp.eq.s32.totalorder %v114, %v117
  %vm121 = vcmp.eq.s32.totalorder %v115, %v117
  %v122 = vsel %vm118, 1, 0
  %v123 = vsel %vm119, 1, 0
  %v124 = vsel %vm120, 1, 0
  %v125 = vsel %vm121, 1, 0
  %v126 = vcvt.s32.f32 %v122
  %v127 = vcvt.s32.f32 %v123
  %v128 = vcvt.s32.f32 %v124
  %v129 = vcvt.s32.f32 %v125
  %v130 = vld [vmem:[%s1] sm:$0xff]
  %v131 = vld [vmem:[%s1 + $0x8] sm:$0xff]
  %v132 = vld [vmem:[%s1 + $0x10] sm:$0xff]
  %v133 = vld [vmem:[%s1 + $0x18] sm:$0xff]
  %v134 = vsub.f32 %v130, %v97
  %v135 = vsub.f32 %v131, %v98
  %v136 = vsub.f32 %v132, %v99
  %v137 = vsub.f32 %v133, %v100
  %v138 = vmul.f32 %v92, %v134
  %v139 = vmul.f32 %v93, %v135
  %v140 = vmul.f32 %v94, %v136
  %v141 = vmul.f32 %v95, %v137
  %v142 = vxor.u32 %v138, 2147483648
  %v143 = vxor.u32 %v139, 2147483648
  %v144 = vxor.u32 %v140, 2147483648
  %v145 = vxor.u32 %v141, 2147483648
  %v146 = vmul.f32 %v142, 1.442695
  %v147 = vpow.pop %v146
  %v148 = vmul.f32 %v143, 1.442695
  %v149 = vpow.pop %v148
  %v150 = vmul.f32 %v144, 1.442695
  %v151 = vpow.pop %v150
  %v152 = vmul.f32 %v145, 1.442695
  %v153 = vpow.pop %v152
  %v154 = vadd.f32 %v147, 1.0
  %v155 = vadd.f32 %v149, 1.0
  %v156 = vadd.f32 %v151, 1.0
  %v157 = vadd.f32 %v153, 1.0
  %v158 = vrcp.pop %v154
  %v159 = vmul.f32 %v154, %v158
  %v160 = vsub.f32 1.0, %v159
  %v161 = vmul.f32 %v158, %v160
  %v162 = vadd.f32 %v158, %v161
  %vm163 = vweird.f32 %v154
  %vm164 = vweird.f32 %v158
  %vm165 = vmor %vm163, %vm164
  %v166 = vsel %vm165, %v158, %v162
  %v167 = vand.u32 2147483647, %v154
  %vm168 = vcmp.eq.f32.partialorder %v167, 8.507059e+37
  %v169 = vand.u32 %v154, 2147483648
  %v170 = vor.u32 1.1754944e-38, %v169
  %v171 = vsel %vm168, %v170, %v166
  %v172 = vmul.f32 1.0, %v171
  %v173 = vrcp.pop %v155
  %v174 = vmul.f32 %v155, %v173
  %v175 = vsub.f32 1.0, %v174
  %v176 = vmul.f32 %v173, %v175
  %v177 = vadd.f32 %v173, %v176
  %vm178 = vweird.f32 %v155
  %vm179 = vweird.f32 %v173
  %vm180 = vmor %vm178, %vm179
  %v181 = vsel %vm180, %v173, %v177
  %v182 = vand.u32 2147483647, %v155
  %vm183 = vcmp.eq.f32.partialorder %v182, 8.507059e+37
  %v184 = vand.u32 %v155, 2147483648
  %v185 = vor.u32 1.1754944e-38, %v184
  %v186 = vsel %vm183, %v185, %v181
  %v187 = vmul.f32 1.0, %v186
  %v188 = vrcp.pop %v156
  %v189 = vmul.f32 %v156, %v188
  %v190 = vsub.f32 1.0, %v189
  %v191 = vmul.f32 %v188, %v190
  %v192 = vadd.f32 %v188, %v191
  %vm193 = vweird.f32 %v156
  %vm194 = vweird.f32 %v188
  %vm195 = vmor %vm193, %vm194
  %v196 = vsel %vm195, %v188, %v192
  %v197 = vand.u32 2147483647, %v156
  %vm198 = vcmp.eq.f32.partialorder %v197, 8.507059e+37
  %v199 = vand.u32 %v156, 2147483648
  %v200 = vor.u32 1.1754944e-38, %v199
  %v201 = vsel %vm198, %v200, %v196
  %v202 = vmul.f32 1.0, %v201
  %v203 = vrcp.pop %v157
  %v204 = vmul.f32 %v157, %v203
  %v205 = vsub.f32 1.0, %v204
  %v206 = vmul.f32 %v203, %v205
  %v207 = vadd.f32 %v203, %v206
  %vm208 = vweird.f32 %v157
  %vm209 = vweird.f32 %v203
  %vm210 = vmor %vm208, %vm209
  %v211 = vsel %vm210, %v203, %v207
  %v212 = vand.u32 2147483647, %v157
  %vm213 = vcmp.eq.f32.partialorder %v212, 8.507059e+37
  %v214 = vand.u32 %v157, 2147483648
  %v215 = vor.u32 1.1754944e-38, %v214
  %v216 = vsel %vm213, %v215, %v211
  %v217 = vmul.f32 1.0, %v216
  %v218 = vmul.f32 %v102, %v172
  %v219 = vmul.f32 %v103, %v187
  %v220 = vmul.f32 %v104, %v202
  %v221 = vmul.f32 %v105, %v217
  %v222 = vmul.f32 %v218, %v107
  %v223 = vmul.f32 %v219, %v108
  %v224 = vmul.f32 %v220, %v109
  %v225 = vmul.f32 %v221, %v110
  %v226 = vadd.f32 %v222, %v223
  %v227 = vadd.f32 %v226, %v224
  %v228 = vadd.f32 %v227, %v225
  %v229 = vrot.slane %v228, 4
  %v230 = vadd.f32 %v228, %v229
  %v231 = vrot.slane %v230, 2
  %v232 = vadd.f32 %v230, %v231
  %v233 = vrot.slane %v232, 1
  %v234 = vadd.f32 %v232, %v233
  %v235 = vadd.f32 %v234, %v67
  %v236 = vadd.f32 %v218, %v219
  %v237 = vadd.f32 %v236, %v220
  %v238 = vadd.f32 %v237, %v221
  %v239 = vrot.slane %v238, 4
  %v240 = vadd.f32 %v238, %v239
  %v241 = vrot.slane %v240, 2
  %v242 = vadd.f32 %v240, %v241
  %v243 = vrot.slane %v242, 1
  %v244 = vadd.f32 %v242, %v243
  %v245 = vadd.f32 %v244, %v73
  %v246 = vmul.f32 %v90, %v24
  %v247 = vadd.f32 %v246, %v91
  %v248 = vadd.f32 %v247, %v235
  %v249 = vadd.f32 %v90, %v20
  %v250 = vadd.f32 %v249, %v245
  %v251 = vadd.f32 %v250, 1e-08
  %v252 = vrcp.pop %v251
  %v253 = vmul.f32 %v251, %v252
  %v254 = vsub.f32 1.0, %v253
  %v255 = vmul.f32 %v252, %v254
  %v256 = vadd.f32 %v252, %v255
  %vm257 = vweird.f32 %v251
  %vm258 = vweird.f32 %v252
  %vm259 = vmor %vm257, %vm258
  %v260 = vsel %vm259, %v252, %v256
  %v261 = vand.u32 2147483647, %v251
  %vm262 = vcmp.eq.f32.partialorder %v261, 8.507059e+37
  %v263 = vand.u32 %v251, 2147483648
  %v264 = vor.u32 1.1754944e-38, %v263
  %v265 = vsel %vm262, %v264, %v260
  %v266 = vmul.f32 %v248, %v265
  %v267 = vperm.slane %v266, 0
  %v268 = vmul.f32 %v267, %v126
  %v269 = vmul.f32 %v267, %v127
  %v270 = vmul.f32 %v267, %v128
  %v271 = vmul.f32 %v267, %v129
  %vm272 = vcmask 261120
  %v273 = vsel %vm272, %v268, 0.0
  %274 = vadd.xlane.f32.xlu0 %v273
  %v275 = vpop.xlane.xlu0 %274
  %v276 = vsel %vm272, %v269, 0.0
  %277 = vadd.xlane.f32.xlu0 %v276
  %v278 = vpop.xlane.xlu0 %277
  %v279 = vsel %vm272, %v270, 0.0
  %280 = vadd.xlane.f32.xlu0 %v279
  %v281 = vpop.xlane.xlu0 %280
  %v282 = vsel %vm272, %v271, 0.0
  %283 = vadd.xlane.f32.xlu0 %v282
  %v284 = vpop.xlane.xlu0 %283
  %289 = vrot.lane.b32.xlu0 %v126, 32
  %v290 = vpop.permute.xlu0 %289
  %291 = vrot.lane.b32.xlu0 %v127, 32
  %v292 = vpop.permute.xlu0 %291
  %293 = vrot.lane.b32.xlu0 %v128, 32
  %v294 = vpop.permute.xlu0 %293
  %295 = vrot.lane.b32.xlu0 %v129, 32
  %v296 = vpop.permute.xlu0 %295
  %v301 = vmul.f32 %v267, %v290
  %v302 = vmul.f32 %v267, %v292
  %v303 = vmul.f32 %v267, %v294
  %v304 = vmul.f32 %v267, %v296
  %309 = vrot.lane.b32.xlu0 %v301, 96
  %v310 = vpop.permute.xlu0 %309
  %311 = vrot.lane.b32.xlu0 %v302, 96
  %v312 = vpop.permute.xlu0 %311
  %313 = vrot.lane.b32.xlu0 %v303, 96
  %v314 = vpop.permute.xlu0 %313
  %315 = vrot.lane.b32.xlu0 %v304, 96
  %v316 = vpop.permute.xlu0 %315
  %v321 = vsel %vm272, %v310, 0.0
  %322 = vadd.xlane.f32.xlu0 %v321
  %v323 = vpop.xlane.xlu0 %322
  %v324 = vsel %vm272, %v312, 0.0
  %325 = vadd.xlane.f32.xlu0 %v324
  %v326 = vpop.xlane.xlu0 %325
  %v327 = vsel %vm272, %v314, 0.0
  %328 = vadd.xlane.f32.xlu0 %v327
  %v329 = vpop.xlane.xlu0 %328
  %v330 = vsel %vm272, %v316, 0.0
  %331 = vadd.xlane.f32.xlu0 %v330
  %v332 = vpop.xlane.xlu0 %331
  %333 = vrot.lane.b32.xlu0 %v126, 64
  %v334 = vpop.permute.xlu0 %333
  %335 = vrot.lane.b32.xlu0 %v127, 64
  %v336 = vpop.permute.xlu0 %335
  %337 = vrot.lane.b32.xlu0 %v128, 64
  %v338 = vpop.permute.xlu0 %337
  %339 = vrot.lane.b32.xlu0 %v129, 64
  %v340 = vpop.permute.xlu0 %339
  %v345 = vmul.f32 %v267, %v334
  %v346 = vmul.f32 %v267, %v336
  %v347 = vmul.f32 %v267, %v338
  %v348 = vmul.f32 %v267, %v340
  %353 = vrot.lane.b32.xlu0 %v345, 64
  %v354 = vpop.permute.xlu0 %353
  %355 = vrot.lane.b32.xlu0 %v346, 64
  %v356 = vpop.permute.xlu0 %355
  %357 = vrot.lane.b32.xlu0 %v347, 64
  %v358 = vpop.permute.xlu0 %357
  %359 = vrot.lane.b32.xlu0 %v348, 64
  %v360 = vpop.permute.xlu0 %359
  %v365 = vsel %vm272, %v354, 0.0
  %366 = vadd.xlane.f32.xlu0 %v365
  %v367 = vpop.xlane.xlu0 %366
  %v368 = vsel %vm272, %v356, 0.0
  %369 = vadd.xlane.f32.xlu0 %v368
  %v370 = vpop.xlane.xlu0 %369
  %v371 = vsel %vm272, %v358, 0.0
  %372 = vadd.xlane.f32.xlu0 %v371
  %v373 = vpop.xlane.xlu0 %372
  %v374 = vsel %vm272, %v360, 0.0
  %375 = vadd.xlane.f32.xlu0 %v374
  %v376 = vpop.xlane.xlu0 %375
  %377 = vrot.lane.b32.xlu0 %v126, 96
  %v378 = vpop.permute.xlu0 %377
  %379 = vrot.lane.b32.xlu0 %v127, 96
  %v380 = vpop.permute.xlu0 %379
  %381 = vrot.lane.b32.xlu0 %v128, 96
  %v382 = vpop.permute.xlu0 %381
  %383 = vrot.lane.b32.xlu0 %v129, 96
  %v384 = vpop.permute.xlu0 %383
  %v389 = vmul.f32 %v267, %v378
  %v390 = vmul.f32 %v267, %v380
  %v391 = vmul.f32 %v267, %v382
  %v392 = vmul.f32 %v267, %v384
  %397 = vrot.lane.b32.xlu0 %v389, 32
  %v398 = vpop.permute.xlu0 %397
  %399 = vrot.lane.b32.xlu0 %v390, 32
  %v400 = vpop.permute.xlu0 %399
  %401 = vrot.lane.b32.xlu0 %v391, 32
  %v402 = vpop.permute.xlu0 %401
  %403 = vrot.lane.b32.xlu0 %v392, 32
  %v404 = vpop.permute.xlu0 %403
  %v409 = vsel %vm272, %v398, 0.0
  %410 = vadd.xlane.f32.xlu0 %v409
  %v411 = vpop.xlane.xlu0 %410
  %v412 = vsel %vm272, %v400, 0.0
  %413 = vadd.xlane.f32.xlu0 %v412
  %v414 = vpop.xlane.xlu0 %413
  %v415 = vsel %vm272, %v402, 0.0
  %416 = vadd.xlane.f32.xlu0 %v415
  %v417 = vpop.xlane.xlu0 %416
  %v418 = vsel %vm272, %v404, 0.0
  %419 = vadd.xlane.f32.xlu0 %v418
  %v420 = vpop.xlane.xlu0 %419
  %v421 = vsel %vm272, %v275, %v323
  %v422 = vsel %vm272, %v278, %v326
  %v423 = vsel %vm272, %v281, %v329
  %v424 = vsel %vm272, %v284, %v332
  %vm425 = vcmask 523264
  %v426 = vsel %vm425, %v421, %v367
  %v427 = vsel %vm425, %v422, %v370
  %v428 = vsel %vm425, %v423, %v373
  %v429 = vsel %vm425, %v424, %v376
  %vm430 = vcmask 785408
  %v431 = vsel %vm430, %v426, %v411
  %v432 = vsel %vm430, %v427, %v414
  %v433 = vsel %vm430, %v428, %v417
  %v434 = vsel %vm430, %v429, %v420
  %v435 = vsub.f32 %v431, %v97
  %v436 = vsub.f32 %v432, %v98
  %v437 = vsub.f32 %v433, %v99
  %v438 = vsub.f32 %v434, %v100
  %v439 = vmul.f32 %v92, %v435
  %v440 = vmul.f32 %v93, %v436
  %v441 = vmul.f32 %v94, %v437
  %v442 = vmul.f32 %v95, %v438
  %v443 = vxor.u32 %v439, 2147483648
  %v444 = vxor.u32 %v440, 2147483648
  %v445 = vxor.u32 %v441, 2147483648
  %v446 = vxor.u32 %v442, 2147483648
  %v447 = vmul.f32 %v443, 1.442695
  %v448 = vpow.pop %v447
  %v449 = vmul.f32 %v444, 1.442695
  %v450 = vpow.pop %v449
  %v451 = vmul.f32 %v445, 1.442695
  %v452 = vpow.pop %v451
  %v453 = vmul.f32 %v446, 1.442695
  %v454 = vpow.pop %v453
  %v455 = vadd.f32 %v448, 1.0
  %v456 = vadd.f32 %v450, 1.0
  %v457 = vadd.f32 %v452, 1.0
  %v458 = vadd.f32 %v454, 1.0
  %v459 = vrcp.pop %v455
  %v460 = vmul.f32 %v455, %v459
  %v461 = vsub.f32 1.0, %v460
  %v462 = vmul.f32 %v459, %v461
  %v463 = vadd.f32 %v459, %v462
  %vm464 = vweird.f32 %v455
  %vm465 = vweird.f32 %v459
  %vm466 = vmor %vm464, %vm465
  %v467 = vsel %vm466, %v459, %v463
  %v468 = vand.u32 2147483647, %v455
  %vm469 = vcmp.eq.f32.partialorder %v468, 8.507059e+37
  %v470 = vand.u32 %v455, 2147483648
  %v471 = vor.u32 1.1754944e-38, %v470
  %v472 = vsel %vm469, %v471, %v467
  %v473 = vmul.f32 1.0, %v472
  %v474 = vrcp.pop %v456
  %v475 = vmul.f32 %v456, %v474
  %v476 = vsub.f32 1.0, %v475
  %v477 = vmul.f32 %v474, %v476
  %v478 = vadd.f32 %v474, %v477
  %vm479 = vweird.f32 %v456
  %vm480 = vweird.f32 %v474
  %vm481 = vmor %vm479, %vm480
  %v482 = vsel %vm481, %v474, %v478
  %v483 = vand.u32 2147483647, %v456
  %vm484 = vcmp.eq.f32.partialorder %v483, 8.507059e+37
  %v485 = vand.u32 %v456, 2147483648
  %v486 = vor.u32 1.1754944e-38, %v485
  %v487 = vsel %vm484, %v486, %v482
  %v488 = vmul.f32 1.0, %v487
  %v489 = vrcp.pop %v457
  %v490 = vmul.f32 %v457, %v489
  %v491 = vsub.f32 1.0, %v490
  %v492 = vmul.f32 %v489, %v491
  %v493 = vadd.f32 %v489, %v492
  %vm494 = vweird.f32 %v457
  %vm495 = vweird.f32 %v489
  %vm496 = vmor %vm494, %vm495
  %v497 = vsel %vm496, %v489, %v493
  %v498 = vand.u32 2147483647, %v457
  %vm499 = vcmp.eq.f32.partialorder %v498, 8.507059e+37
  %v500 = vand.u32 %v457, 2147483648
  %v501 = vor.u32 1.1754944e-38, %v500
  %v502 = vsel %vm499, %v501, %v497
  %v503 = vmul.f32 1.0, %v502
  %v504 = vrcp.pop %v458
  %v505 = vmul.f32 %v458, %v504
  %v506 = vsub.f32 1.0, %v505
  %v507 = vmul.f32 %v504, %v506
  %v508 = vadd.f32 %v504, %v507
  %vm509 = vweird.f32 %v458
  %vm510 = vweird.f32 %v504
  %vm511 = vmor %vm509, %vm510
  %v512 = vsel %vm511, %v504, %v508
  %v513 = vand.u32 2147483647, %v458
  %vm514 = vcmp.eq.f32.partialorder %v513, 8.507059e+37
  %v515 = vand.u32 %v458, 2147483648
  %v516 = vor.u32 1.1754944e-38, %v515
  %v517 = vsel %vm514, %v516, %v512
  %v518 = vmul.f32 1.0, %v517
  %v519 = vmul.f32 %v102, %v473
  %v520 = vmul.f32 %v103, %v488
  %v521 = vmul.f32 %v104, %v503
  %v522 = vmul.f32 %v105, %v518
  %v523 = vmul.f32 %v519, %v107
  %v524 = vmul.f32 %v520, %v108
  %v525 = vmul.f32 %v521, %v109
  %v526 = vmul.f32 %v522, %v110
  %v527 = vadd.f32 %v523, %v524
  %v528 = vadd.f32 %v527, %v525
  %v529 = vadd.f32 %v528, %v526
  %v530 = vrot.slane %v529, 4
  %v531 = vadd.f32 %v529, %v530
  %v532 = vrot.slane %v531, 2
  %v533 = vadd.f32 %v531, %v532
  %v534 = vrot.slane %v533, 1
  %v535 = vadd.f32 %v533, %v534
  %v536 = vadd.f32 %v535, %v67
  %v537 = vadd.f32 %v519, %v520
  %v538 = vadd.f32 %v537, %v521
  %v539 = vadd.f32 %v538, %v522
  %v540 = vrot.slane %v539, 4
  %v541 = vadd.f32 %v539, %v540
  %v542 = vrot.slane %v541, 2
  %v543 = vadd.f32 %v541, %v542
  %v544 = vrot.slane %v543, 1
  %v545 = vadd.f32 %v543, %v544
  %v546 = vadd.f32 %v545, %v73
  %v547 = vmul.f32 %v90, %v266
  %v548 = vadd.f32 %v547, %v91
  %v549 = vadd.f32 %v548, %v536
  %v550 = vadd.f32 %v249, %v546
  %v551 = vadd.f32 %v550, 1e-08
  %v552 = vrcp.pop %v551
  %v553 = vmul.f32 %v551, %v552
  %v554 = vsub.f32 1.0, %v553
  %v555 = vmul.f32 %v552, %v554
  %v556 = vadd.f32 %v552, %v555
  %vm557 = vweird.f32 %v551
  %vm558 = vweird.f32 %v552
  %vm559 = vmor %vm557, %vm558
  %v560 = vsel %vm559, %v552, %v556
  %v561 = vand.u32 2147483647, %v551
  %vm562 = vcmp.eq.f32.partialorder %v561, 8.507059e+37
  %v563 = vand.u32 %v551, 2147483648
  %v564 = vor.u32 1.1754944e-38, %v563
  %v565 = vsel %vm562, %v564, %v560
  %v566 = vmul.f32 %v549, %v565
  %567 = vst [vmem:[%s5] sm:$0x1] %v566
  // Predicated region
  $region22: #{ltc_cell_forward.1} parent=0 // pred_check
    _
  $region23: #{ltc_cell_forward.1} parent=0 // pred_check_branch
    %569 = sbr.rel (0) target = $region25
  $region24: #{ltc_cell_forward.1} parent=0 // pred_region
    _
  $region25: #{ltc_cell_forward.1} parent=0 // pred_fallthru
    _
  // Predicated region
  $region26: #{ltc_cell_forward.1} parent=0 // pred_check
    _
  $region27: #{ltc_cell_forward.1} parent=0 // pred_check_branch
    %571 = sbr.rel (0) target = $region29
  $region28: #{ltc_cell_forward.1} parent=0 // pred_region
    _
  $region29: #{ltc_cell_forward.1} parent=0 // pred_fallthru
    _

</llo_original>
